<compile_context>
chip_gen: v5e
topology: v5e:2x2
jax: 0.10.0
libtpu: 0.0.40
codegen_flags: <defaults>
</compile_context>

<pallas_src>
import numpy as np
import jax
import jax.numpy as jnp
from jax.experimental import pallas as pl
from jax.experimental.pallas import tpu as pltpu

# ---------------- small, self-consistent hyperparameters ----------------
EMBEDDING_SIZE = 32      # embedding_size
HIDDEN_SIZE    = 32      # hidden_size (conv out channels)
VOCAB_SIZE     = 100     # vocab_size
TEXT_MAX_LEN   = 16      # text_max_len (seq length)
LABEL_NUM      = 2       # label_num
KERNEL_SIZES   = (3, 4, 5)
BATCH          = 2

KMAX    = max(KERNEL_SIZES)
NCONV   = len(KERNEL_SIZES)
H3      = HIDDEN_SIZE * NCONV            # 96 real fused conv channels
HPAD    = 128                            # lane-padded fused conv channels
VPAD    = 128                            # lane-padded vocab (one-hot gather width)
OUT_PAD = 128                            # lane-dense softmax output width
BL      = BATCH * TEXT_MAX_LEN           # 32 stacked (batch, position) rows
KE      = KMAX * EMBEDDING_SIZE          # 160 fused conv contraction size
NEG_BIG = -1e30                          # additive "invalid" logit / mask value


# ---------------- the single fused Pallas kernel ----------------
def textcnn_fused_kernel(ids_ref, emb_ref, shift_ref, wc_ref, bm_ref,
                         wl_ref, bl_ref, o_ref):
    # ids_ref  : (BL, 1)        int32 token ids, batch rows stacked
    # emb_ref  : (VPAD, E)      embedding table, zero-padded to 128 rows
    # shift_ref: (KMAX*BL, BL)  constant 0/1 stacked shift matrices (tap j block)
    # wc_ref   : (KMAX*E, HPAD) fused conv weight (taps stacked along K, groups
    #                           along N, zero-padded to 128 output lanes)
    # bm_ref   : (BL, HPAD)     conv bias + position-validity mask (-1e30 where the
    #                           position doesn't exist for that kernel width)
    # wl_ref   : (HPAD, 128)    linear weight (block feature order, zero-padded)
    # bl_ref   : (1, 128)       linear bias (pad lanes = -1e30)
    # o_ref    : (B, 128)       softmax probabilities (pad lanes ~ 0)

    # 1) embedding gather as a one-hot MXU matmul (no scalar loops / masked stores)
    ids = ids_ref[...]                                                  # (BL, 1) i32
    vocab_iota = jax.lax.broadcasted_iota(jnp.int32, (BL, VPAD), 1)
    onehot = jnp.where(ids == vocab_iota, 1.0, 0.0)                     # (BL, VPAD)
    x = jnp.dot(onehot, emb_ref[...],
                preferred_element_type=jnp.float32)                     # (BL, E)

    # 2) all KMAX shifted copies of the token matrix via ONE constant 0/1 matmul
    #    (rows j*BL + r hold x[r + j]; out-of-range rows are zero -> they only ever
    #     hit zero weights or positions masked before the pool)
    xs = jnp.dot(shift_ref[...], x,
                 preferred_element_type=jnp.float32)                    # (KMAX*BL, E)

    # 3) fused conv over all widths: accumulate per-tap matmuls; start from the
    #    (conv bias + -1e30 validity) constant so no separate mask/iota pass
    y = bm_ref[...]                                                     # (BL, HPAD)
    for j in range(KMAX):
        y = y + jnp.dot(xs[j * BL:(j + 1) * BL, :],
                        wc_ref[j * EMBEDDING_SIZE:(j + 1) * EMBEDDING_SIZE, :],
                        preferred_element_type=jnp.float32)

    # 4) global max-pool: sublane-aligned reshape + reduce (no per-batch slices)
    feats = jnp.max(y.reshape(BATCH, TEXT_MAX_LEN, HPAD), axis=1)       # (B, HPAD)

    # 5) linear + softmax, lane-dense 128-wide output (pad lanes -> ~0 prob)
    logits = jnp.dot(feats, wl_ref[...],
                     preferred_element_type=jnp.float32) + bl_ref[...]  # (B, 128)
    m = jnp.max(logits, axis=-1, keepdims=True)
    e = jnp.exp(logits - m)
    o_ref[...] = e / jnp.sum(e, axis=-1, keepdims=True)


def _textcnn_pallas(ids2d, prep):
    return pl.pallas_call(
        textcnn_fused_kernel,
        out_shape=jax.ShapeDtypeStruct((BATCH, OUT_PAD), jnp.float32),
        grid=(1,),
        in_specs=[
            pl.BlockSpec((BL, 1), lambda i: (0, 0)),                    # ids
            pl.BlockSpec((VPAD, EMBEDDING_SIZE), lambda i: (0, 0)),     # embedding
            pl.BlockSpec((KMAX * BL, BL), lambda i: (0, 0)),            # shift mats
            pl.BlockSpec((KE, HPAD), lambda i: (0, 0)),                 # fused conv W
            pl.BlockSpec((BL, HPAD), lambda i: (0, 0)),                 # bias + mask
            pl.BlockSpec((HPAD, OUT_PAD), lambda i: (0, 0)),            # linear W
            pl.BlockSpec((1, OUT_PAD), lambda i: (0, 0)),               # linear b
        ],
        out_specs=pl.BlockSpec((BATCH, OUT_PAD), lambda i: (0, 0)),
        compiler_params=pltpu.CompilerParams(dimension_semantics=("arbitrary",)),
    )(ids2d, prep["emb"], prep["shift"], prep["w_conv"], prep["bias_mask"],
      prep["w_lin"], prep["b_lin"])


# ---------------- one-time weight / constant preprocessing ----------------
def prepare_params(params):
    E, H, L = EMBEDDING_SIZE, HIDDEN_SIZE, TEXT_MAX_LEN

    # embedding table zero-padded to 128 rows for the one-hot gather matmul
    emb = jnp.zeros((VPAD, E), jnp.float32).at[:VOCAB_SIZE].set(params["embedding"])

    # fused conv RHS: PyTorch (H, E, k) -> (k*E, H) per width, zero-pad K to KMAX*E,
    # concat widths along N, zero-pad N to 128 lanes
    w_conv = jnp.zeros((KE, HPAD), jnp.float32)
    b_conv = jnp.zeros((HPAD,), jnp.float32)
    for g, k in enumerate(KERNEL_SIZES):
        wf = jnp.transpose(params[f"conv{k}_w"], (2, 1, 0)).reshape(k * E, H)
        w_conv = w_conv.at[:k * E, g * H:(g + 1) * H].set(wf)
        b_conv = b_conv.at[g * H:(g + 1) * H].set(params[f"conv{k}_b"])

    # additive (conv bias + position validity) constant: -1e30 where position p
    # doesn't exist for kernel width k; 0 on the 32 zero-pad channels (so their
    # pooled value is exactly 0, never -inf -> no NaN through the zero linear rows)
    mask = np.zeros((BL, HPAD), np.float32)
    for g, k in enumerate(KERNEL_SIZES):
        for r in range(BL):
            if (r % L) > L - k:
                mask[r, g * H:(g + 1) * H] = NEG_BIG
    bias_mask = jnp.asarray(mask) + b_conv[None, :]

    # stacked 0/1 shift matrices: row j*BL + r selects source row r + j (zero row if
    # it would run past the stacked batch -- those only feed masked positions)
    shift = np.zeros((KMAX * BL, BL), np.float32)
    for j in range(KMAX):
        for r in range(BL - j):
            shift[j * BL + r, r + j] = 1.0
    shift = jnp.asarray(shift)

    # PyTorch: torch.cat(poolings, -1).view(B,-1) => interleaved feature f = c*3 + g.
    # Kernel produces block order f' = g*H + c -> permute the linear weight once.
    w_blk = jnp.transpose(params["linear_w"].reshape(LABEL_NUM, H, NCONV),
                          (0, 2, 1)).reshape(LABEL_NUM, H3)
    w_lin = jnp.zeros((HPAD, OUT_PAD), jnp.float32).at[:H3, :LABEL_NUM].set(w_blk.T)
    b_lin = jnp.full((1, OUT_PAD), NEG_BIG,
                     jnp.float32).at[0, :LABEL_NUM].set(params["linear_b"])

    return {"emb": emb, "shift": shift, "w_conv": w_conv,
            "bias_mask": bias_mask, "w_lin": w_lin, "b_lin": b_lin}


# ---------------- full forward (only a free reshape + tiny slice as glue) --------
@jax.jit
def textcnn_forward(token_ids, prep):
    ids2d = token_ids.reshape(BATCH * TEXT_MAX_LEN, 1).astype(jnp.int32)  # layout no-op
    probs = _textcnn_pallas(ids2d, prep)                                   # (B, 128)
    return probs[:, :LABEL_NUM]


# ---------------- pure-JAX reference (mirrors the PyTorch forward) ----------------
def textcnn_reference(token_ids, params):
    B, _ = token_ids.shape
    x_embed = jnp.take(params["embedding"], token_ids, axis=0)          # (B, L, E)
    x_ncl = jnp.transpose(x_embed, (0, 2, 1))                           # (B, E, L)
    pooled = []
    for k in KERNEL_SIZES:
        w = params[f"conv{k}_w"]                                        # (H, E, k)
        out = jax.lax.conv_general_dilated(
            x_ncl, w, window_strides=(1,), padding="VALID",
            dimension_numbers=("NCH", "OIH", "NCH"))
        out = out + params[f"conv{k}_b"][None, :, None]
        pooled.append(jnp.max(out, axis=-1))                            # (B, H)
    x_cat = jnp.stack(pooled, axis=-1).reshape(B, -1)                   # interleaved
    logits = x_cat @ params["linear_w"].T + params["linear_b"]
    return jax.nn.softmax(logits, axis=-1)


def init_params(key):
    keys = jax.random.split(key, 3 + 2 * len(KERNEL_SIZES))
    params = {
        "embedding": 0.1 * jax.random.normal(
            keys[0], (VOCAB_SIZE, EMBEDDING_SIZE), jnp.float32),
        "linear_w": 0.1 * jax.random.normal(
            keys[1], (LABEL_NUM, HIDDEN_SIZE * len(KERNEL_SIZES)), jnp.float32),
        "linear_b": 0.1 * jax.random.normal(keys[2], (LABEL_NUM,), jnp.float32),
    }
    for i, k in enumerate(KERNEL_SIZES):
        params[f"conv{k}_w"] = 0.1 * jax.random.normal(
            keys[3 + 2 * i], (HIDDEN_SIZE, EMBEDDING_SIZE, k), jnp.float32)
        params[f"conv{k}_b"] = 0.1 * jax.random.normal(
            keys[4 + 2 * i], (HIDDEN_SIZE,), jnp.float32)
    return params


if __name__ == "__main__":
    key = jax.random.PRNGKey(0)
    pkey, xkey = jax.random.split(key)
    params = init_params(pkey)
    prep = prepare_params(params)    # one-time weight fusing / permutation / padding
    token_ids = jax.random.randint(xkey, (BATCH, TEXT_MAX_LEN), 0, VOCAB_SIZE,
                                   dtype=jnp.int32)

    out = jax.block_until_ready(textcnn_forward(token_ids, prep))
    ref = jax.block_until_ready(textcnn_reference(token_ids, params))

    assert out.shape == (BATCH, LABEL_NUM)
    assert jnp.allclose(jnp.sum(out, axis=-1), 1.0, atol=1e-5)
    assert jnp.allclose(out, ref, atol=1e-5, rtol=1e-5)
    print("KERNEL_OK")
</pallas_src>

<mosaic_0001>
module attributes {stable_mosaic.version = 11 : i64} {
  func.func @textcnn_fused_kernel(%arg0: i32, %arg1: memref<32x1xi32, #tpu.memory_space<vmem>>, %arg2: memref<128x32xf32, #tpu.memory_space<vmem>>, %arg3: memref<160x32xf32, #tpu.memory_space<vmem>>, %arg4: memref<160x128xf32, #tpu.memory_space<vmem>>, %arg5: memref<32x128xf32, #tpu.memory_space<vmem>>, %arg6: memref<128x128xf32, #tpu.memory_space<vmem>>, %arg7: memref<1x128xf32, #tpu.memory_space<vmem>>, %arg8: memref<2x128xf32, #tpu.memory_space<vmem>>) attributes {dimension_semantics = [#tpu.dimension_semantics<arbitrary>], iteration_bounds = array<i64: 1>, scalar_prefetch = 0 : i64, scratch_operands = 0 : i64, tpu.core_type = #tpu.core_type<tc>, window_params = [{pipeline_mode = #tpu.pipeline_mode<synchronous>, transform_indices = @transform_0, window_bounds = array<i64: 32, 1>}, {pipeline_mode = #tpu.pipeline_mode<synchronous>, transform_indices = @transform_1, window_bounds = array<i64: 128, 32>}, {pipeline_mode = #tpu.pipeline_mode<synchronous>, transform_indices = @transform_2, window_bounds = array<i64: 160, 32>}, {pipeline_mode = #tpu.pipeline_mode<synchronous>, transform_indices = @transform_3, window_bounds = array<i64: 160, 128>}, {pipeline_mode = #tpu.pipeline_mode<synchronous>, transform_indices = @transform_4, window_bounds = array<i64: 32, 128>}, {pipeline_mode = #tpu.pipeline_mode<synchronous>, transform_indices = @transform_5, window_bounds = array<i64: 128, 128>}, {pipeline_mode = #tpu.pipeline_mode<synchronous>, transform_indices = @transform_6, window_bounds = array<i64: 1, 128>}, {pipeline_mode = #tpu.pipeline_mode<synchronous>, transform_indices = @transform_7, window_bounds = array<i64: 2, 128>}]} {
    %c0 = arith.constant 0 : index
    %c0_0 = arith.constant 0 : index
    %0 = vector.load %arg1[%c0, %c0_0] : memref<32x1xi32, #tpu.memory_space<vmem>>, vector<32x1xi32>
    %1 = tpu.iota {dimensions = array<i32: 1>} : vector<32x128xi32>
    %2 = vector.broadcast %0 : vector<32x1xi32> to vector<32x128xi32>
    %3 = arith.cmpi eq, %2, %1 : vector<32x128xi32>
    %cst = arith.constant 1.000000e+00 : f32
    %cst_1 = arith.constant 0.000000e+00 : f32
    %4 = vector.broadcast %cst : f32 to vector<32x128xf32>
    %5 = vector.broadcast %cst_1 : f32 to vector<32x128xf32>
    %6 = arith.select %3, %4, %5 : vector<32x128xi1>, vector<32x128xf32>
    %c0_2 = arith.constant 0 : index
    %c0_3 = arith.constant 0 : index
    %7 = vector.load %arg2[%c0_2, %c0_3] : memref<128x32xf32, #tpu.memory_space<vmem>>, vector<128x32xf32>
    %cst_4 = arith.constant dense<0.000000e+00> : vector<32x32xf32>
    %8 = tpu.matmul %6, %7, %cst_4 {dimension_numbers = #tpu.dot_dimension_numbers<[1], [0], [0], [1], [0, 0, 1, 1], [], []>} : vector<32x128xf32>, vector<128x32xf32>, vector<32x32xf32> -> vector<32x32xf32>
    %c0_5 = arith.constant 0 : index
    %c0_6 = arith.constant 0 : index
    %9 = vector.load %arg3[%c0_5, %c0_6] : memref<160x32xf32, #tpu.memory_space<vmem>>, vector<160x32xf32>
    %cst_7 = arith.constant dense<0.000000e+00> : vector<160x32xf32>
    %10 = tpu.matmul %9, %8, %cst_7 {dimension_numbers = #tpu.dot_dimension_numbers<[1], [0], [0], [1], [0, 0, 1, 1], [], []>} : vector<160x32xf32>, vector<32x32xf32>, vector<160x32xf32> -> vector<160x32xf32>
    %c0_8 = arith.constant 0 : index
    %c0_9 = arith.constant 0 : index
    %11 = vector.load %arg5[%c0_8, %c0_9] : memref<32x128xf32, #tpu.memory_space<vmem>>, vector<32x128xf32>
    %12 = vector.extract_strided_slice %10 {offsets = [0, 0], sizes = [32, 32], strides = [1, 1]} : vector<160x32xf32> to vector<32x32xf32>
    %c0_10 = arith.constant 0 : index
    %c0_11 = arith.constant 0 : index
    %13 = vector.load %arg4[%c0_10, %c0_11] : memref<160x128xf32, #tpu.memory_space<vmem>>, vector<32x128xf32>
    %cst_12 = arith.constant dense<0.000000e+00> : vector<32x128xf32>
    %14 = tpu.matmul %12, %13, %cst_12 {dimension_numbers = #tpu.dot_dimension_numbers<[1], [0], [0], [1], [0, 0, 1, 1], [], []>} : vector<32x32xf32>, vector<32x128xf32>, vector<32x128xf32> -> vector<32x128xf32>
    %15 = arith.addf %11, %14 : vector<32x128xf32>
    %16 = vector.extract_strided_slice %10 {offsets = [32, 0], sizes = [32, 32], strides = [1, 1]} : vector<160x32xf32> to vector<32x32xf32>
    %c32 = arith.constant 32 : index
    %c0_13 = arith.constant 0 : index
    %17 = vector.load %arg4[%c32, %c0_13] : memref<160x128xf32, #tpu.memory_space<vmem>>, vector<32x128xf32>
    %cst_14 = arith.constant dense<0.000000e+00> : vector<32x128xf32>
    %18 = tpu.matmul %16, %17, %cst_14 {dimension_numbers = #tpu.dot_dimension_numbers<[1], [0], [0], [1], [0, 0, 1, 1], [], []>} : vector<32x32xf32>, vector<32x128xf32>, vector<32x128xf32> -> vector<32x128xf32>
    %19 = arith.addf %15, %18 : vector<32x128xf32>
    %20 = vector.extract_strided_slice %10 {offsets = [64, 0], sizes = [32, 32], strides = [1, 1]} : vector<160x32xf32> to vector<32x32xf32>
    %c64 = arith.constant 64 : index
    %c0_15 = arith.constant 0 : index
    %21 = vector.load %arg4[%c64, %c0_15] : memref<160x128xf32, #tpu.memory_space<vmem>>, vector<32x128xf32>
    %cst_16 = arith.constant dense<0.000000e+00> : vector<32x128xf32>
    %22 = tpu.matmul %20, %21, %cst_16 {dimension_numbers = #tpu.dot_dimension_numbers<[1], [0], [0], [1], [0, 0, 1, 1], [], []>} : vector<32x32xf32>, vector<32x128xf32>, vector<32x128xf32> -> vector<32x128xf32>
    %23 = arith.addf %19, %22 : vector<32x128xf32>
    %24 = vector.extract_strided_slice %10 {offsets = [96, 0], sizes = [32, 32], strides = [1, 1]} : vector<160x32xf32> to vector<32x32xf32>
    %c96 = arith.constant 96 : index
    %c0_17 = arith.constant 0 : index
    %25 = vector.load %arg4[%c96, %c0_17] : memref<160x128xf32, #tpu.memory_space<vmem>>, vector<32x128xf32>
    %cst_18 = arith.constant dense<0.000000e+00> : vector<32x128xf32>
    %26 = tpu.matmul %24, %25, %cst_18 {dimension_numbers = #tpu.dot_dimension_numbers<[1], [0], [0], [1], [0, 0, 1, 1], [], []>} : vector<32x32xf32>, vector<32x128xf32>, vector<32x128xf32> -> vector<32x128xf32>
    %27 = arith.addf %23, %26 : vector<32x128xf32>
    %28 = vector.extract_strided_slice %10 {offsets = [128, 0], sizes = [32, 32], strides = [1, 1]} : vector<160x32xf32> to vector<32x32xf32>
    %c128 = arith.constant 128 : index
    %c0_19 = arith.constant 0 : index
    %29 = vector.load %arg4[%c128, %c0_19] : memref<160x128xf32, #tpu.memory_space<vmem>>, vector<32x128xf32>
    %cst_20 = arith.constant dense<0.000000e+00> : vector<32x128xf32>
    %30 = tpu.matmul %28, %29, %cst_20 {dimension_numbers = #tpu.dot_dimension_numbers<[1], [0], [0], [1], [0, 0, 1, 1], [], []>} : vector<32x32xf32>, vector<32x128xf32>, vector<32x128xf32> -> vector<32x128xf32>
    %31 = arith.addf %27, %30 : vector<32x128xf32>
    %32 = vector.shape_cast %31 : vector<32x128xf32> to vector<2x16x128xf32>
    %cst_21 = arith.constant dense<0xFF800000> : vector<2x128xf32>
    %33 = vector.multi_reduction <maximumf>, %32, %cst_21 [1] : vector<2x16x128xf32> to vector<2x128xf32>
    %c0_22 = arith.constant 0 : index
    %c0_23 = arith.constant 0 : index
    %34 = vector.load %arg6[%c0_22, %c0_23] : memref<128x128xf32, #tpu.memory_space<vmem>>, vector<128x128xf32>
    %cst_24 = arith.constant dense<0.000000e+00> : vector<2x128xf32>
    %35 = tpu.matmul %33, %34, %cst_24 {dimension_numbers = #tpu.dot_dimension_numbers<[1], [0], [0], [1], [0, 0, 1, 1], [], []>} : vector<2x128xf32>, vector<128x128xf32>, vector<2x128xf32> -> vector<2x128xf32>
    %c0_25 = arith.constant 0 : index
    %c0_26 = arith.constant 0 : index
    %36 = vector.load %arg7[%c0_25, %c0_26] : memref<1x128xf32, #tpu.memory_space<vmem>>, vector<1x128xf32>
    %37 = vector.broadcast %36 : vector<1x128xf32> to vector<2x128xf32>
    %38 = arith.addf %35, %37 : vector<2x128xf32>
    %cst_27 = arith.constant dense<0xFF800000> : vector<2xf32>
    %39 = vector.multi_reduction <maximumf>, %38, %cst_27 [1] : vector<2x128xf32> to vector<2xf32>
    %40 = vector.shape_cast %39 : vector<2xf32> to vector<2x1xf32>
    %41 = vector.broadcast %40 : vector<2x1xf32> to vector<2x128xf32>
    %42 = arith.subf %38, %41 : vector<2x128xf32>
    %43 = math.exp %42 : vector<2x128xf32>
    %cst_28 = arith.constant dense<0.000000e+00> : vector<2xf32>
    %44 = vector.multi_reduction <add>, %43, %cst_28 [1] : vector<2x128xf32> to vector<2xf32>
    %45 = vector.shape_cast %44 : vector<2xf32> to vector<2x1xf32>
    %46 = vector.broadcast %45 : vector<2x1xf32> to vector<2x128xf32>
    %47 = arith.divf %43, %46 : vector<2x128xf32>
    %c0_29 = arith.constant 0 : index
    %c0_30 = arith.constant 0 : index
    %48 = vector.load %arg8[%c0_29, %c0_30] : memref<2x128xf32, #tpu.memory_space<vmem>>, vector<2x128xf32>
    tpu.vector_store %arg8[%c0_29, %c0_30], %47 {strides = array<i32>} : memref<2x128xf32, #tpu.memory_space<vmem>>, vector<2x128xf32>,
    return
  }
  func.func @transform_0(%arg0: i32) -> (i32, i32) {
    %c0_i32 = arith.constant 0 : i32
    %c0_i32_0 = arith.constant 0 : i32
    %c0_i32_1 = arith.constant 0 : i32
    return %c0_i32, %c0_i32_0 : i32, i32
  }
  func.func @transform_1(%arg0: i32) -> (i32, i32) {
    %c0_i32 = arith.constant 0 : i32
    %c0_i32_0 = arith.constant 0 : i32
    %c0_i32_1 = arith.constant 0 : i32
    return %c0_i32, %c0_i32_0 : i32, i32
  }
  func.func @transform_2(%arg0: i32) -> (i32, i32) {
    %c0_i32 = arith.constant 0 : i32
    %c0_i32_0 = arith.constant 0 : i32
    %c0_i32_1 = arith.constant 0 : i32
    return %c0_i32, %c0_i32_0 : i32, i32
  }
  func.func @transform_3(%arg0: i32) -> (i32, i32) {
    %c0_i32 = arith.constant 0 : i32
    %c0_i32_0 = arith.constant 0 : i32
    %c0_i32_1 = arith.constant 0 : i32
    return %c0_i32, %c0_i32_0 : i32, i32
  }
  func.func @transform_4(%arg0: i32) -> (i32, i32) {
    %c0_i32 = arith.constant 0 : i32
    %c0_i32_0 = arith.constant 0 : i32
    %c0_i32_1 = arith.constant 0 : i32
    return %c0_i32, %c0_i32_0 : i32, i32
  }
  func.func @transform_5(%arg0: i32) -> (i32, i32) {
    %c0_i32 = arith.constant 0 : i32
    %c0_i32_0 = arith.constant 0 : i32
    %c0_i32_1 = arith.constant 0 : i32
    return %c0_i32, %c0_i32_0 : i32, i32
  }
  func.func @transform_6(%arg0: i32) -> (i32, i32) {
    %c0_i32 = arith.constant 0 : i32
    %c0_i32_0 = arith.constant 0 : i32
    %c0_i32_1 = arith.constant 0 : i32
    return %c0_i32, %c0_i32_0 : i32, i32
  }
  func.func @transform_7(%arg0: i32) -> (i32, i32) {
    %c0_i32 = arith.constant 0 : i32
    %c0_i32_0 = arith.constant 0 : i32
    %c0_i32_1 = arith.constant 0 : i32
    return %c0_i32, %c0_i32_0 : i32, i32
  }
}

</mosaic_0001>

<llo_original>
// kernel: textcnn_forward.1
$region0: #{textcnn_forward.1}
  #allocation0 [shape = 'u32[]', space=smem, size = 0x4, offset = 0x4, fixed_abs, tag = 'smem constant byte address 0x4 - core index']
  #allocation1 [shape = 'u32[72,128]{1,0:T(1,128)}', space=vmem, size = 0x9000, scoped, tag = 'internal scratch']
  %s0 = inlined_call_operand.vmem [shape: s32[32,1], index: 0, kind: input, shape index: {}]
  %s1 = inlined_call_operand.vmem [shape: f32[128,32], index: 1, kind: input, shape index: {}]
  %s2 = inlined_call_operand.vmem [shape: f32[160,32], index: 2, kind: input, shape index: {}]
  %s3 = inlined_call_operand.vmem [shape: f32[160,128], index: 3, kind: input, shape index: {}]
  %s4 = inlined_call_operand.vmem [shape: f32[32,128], index: 4, kind: input, shape index: {}]
  %s5 = inlined_call_operand.vmem [shape: f32[128,128], index: 5, kind: input, shape index: {}]
  %s6 = inlined_call_operand.vmem [shape: f32[1,128], index: 6, kind: input, shape index: {}]
  %s7 = inlined_call_operand.hbm [shape: f32[2,128], index: 7, kind: output, shape index: {}]
  %s8 = sld [smem:[#allocation0]]
  $region38: #{textcnn_forward.1} parent=0
    _
  %s10 = ssub.s32 1, %s8
  %s11 = scalar_select 0, %s10, %s8
  $region1: #{textcnn_forward.1} parent=0
    #allocation2 [shape = 'u8[1024]{0}', space=vmem, size = 0x400, scoped, tag = 'output window, operand 0, single buffered']
    #allocation3 [shape = 's32[1]{0}', space=sflag, size = 0x4, scoped, tag = 'scoped memory for textcnn_forward.1']
    %12 = vsyncpa [#allocation3], 0
    // Predicated region
    $region2: #{textcnn_forward.1} parent=1 // pred_check
      _
    $region3: #{textcnn_forward.1} parent=1 // pred_check_branch
      %14 = sbr.rel (0) target = $region5
    $region4: #{textcnn_forward.1} parent=1 // pred_region
      _
    $region5: #{textcnn_forward.1} parent=1 // pred_fallthru
      _
    // Predicated region
    $region6: #{textcnn_forward.1} parent=1 // pred_check
      _
    $region7: #{textcnn_forward.1} parent=1 // pred_check_branch
      %16 = sbr.rel (0) target = $region9
    $region8: #{textcnn_forward.1} parent=1 // pred_region
      _
    $region9: #{textcnn_forward.1} parent=1 // pred_fallthru
      _
    // Predicated region
    $region10: #{textcnn_forward.1} parent=1 // pred_check
      _
    $region11: #{textcnn_forward.1} parent=1 // pred_check_branch
      %18 = sbr.rel (0) target = $region13
    $region12: #{textcnn_forward.1} parent=1 // pred_region
      _
    $region13: #{textcnn_forward.1} parent=1 // pred_fallthru
      _
    // Predicated region
    $region14: #{textcnn_forward.1} parent=1 // pred_check
      _
    $region15: #{textcnn_forward.1} parent=1 // pred_check_branch
      %20 = sbr.rel (0) target = $region17
    $region16: #{textcnn_forward.1} parent=1 // pred_region
      _
    $region17: #{textcnn_forward.1} parent=1 // pred_fallthru
      _
    // Predicated region
    $region18: #{textcnn_forward.1} parent=1 // pred_check
      _
    $region19: #{textcnn_forward.1} parent=1 // pred_check_branch
      %22 = sbr.rel (0) target = $region21
    $region20: #{textcnn_forward.1} parent=1 // pred_region
      _
    $region21: #{textcnn_forward.1} parent=1 // pred_fallthru
      _
    // Predicated region
    $region22: #{textcnn_forward.1} parent=1 // pred_check
      _
    $region23: #{textcnn_forward.1} parent=1 // pred_check_branch
      %24 = sbr.rel (0) target = $region25
    $region24: #{textcnn_forward.1} parent=1 // pred_region
      _
    $region25: #{textcnn_forward.1} parent=1 // pred_fallthru
      _
    // Predicated region
    $region26: #{textcnn_forward.1} parent=1 // pred_check
      _
    $region27: #{textcnn_forward.1} parent=1 // pred_check_branch
      %26 = sbr.rel (0) target = $region29
    $region28: #{textcnn_forward.1} parent=1 // pred_region
      _
    $region29: #{textcnn_forward.1} parent=1 // pred_fallthru
      _
    %v27 = vld [vmem:[%s0] sm:$0xff]
    %v28 = vld [vmem:[%s0 + $0x8] sm:$0xff]
    %v29 = vld [vmem:[%s0 + $0x10] sm:$0xff]
    %v30 = vld [vmem:[%s0 + $0x18] sm:$0xff]
    %v31 = vlaneseq
    %v32 = vand.u32 %v31, 127
    %33 = vset.pattern.permute.xlu0 0
    %34 = vperm.xlu0 %33, %v27
    %v35 = vpop.permute.xlu0 %34
    %36 = vset.pattern.permute.xlu0 0
    %37 = vperm.xlu0 %36, %v28
    %v38 = vpop.permute.xlu0 %37
    %39 = vset.pattern.permute.xlu0 0
    %40 = vperm.xlu0 %39, %v29
    %v41 = vpop.permute.xlu0 %40
    %42 = vset.pattern.permute.xlu0 0
    %43 = vperm.xlu0 %42, %v30
    %v44 = vpop.permute.xlu0 %43
    %vm45 = vcmp.eq.s32.totalorder %v35, %v32
    %vm46 = vcmp.eq.s32.totalorder %v38, %v32
    %vm47 = vcmp.eq.s32.totalorder %v41, %v32
    %vm48 = vcmp.eq.s32.totalorder %v44, %v32
    %v49 = vsel %vm45, 1.0, 0.0
    %v50 = vsel %vm46, 1.0, 0.0
    %v51 = vsel %vm47, 1.0, 0.0
    %v52 = vsel %vm48, 1.0, 0.0
    %v53 = vld [vmem:[%s1] sm:$0xff]
    %v54 = vld [vmem:[%s1 + $0x8] sm:$0xff]
    %v55 = vld [vmem:[%s1 + $0x10] sm:$0xff]
    %v56 = vld [vmem:[%s1 + $0x18] sm:$0xff]
    %v57 = vld [vmem:[%s1 + $0x20] sm:$0xff]
    %v58 = vld [vmem:[%s1 + $0x28] sm:$0xff]
    %v59 = vld [vmem:[%s1 + $0x30] sm:$0xff]
    %v60 = vld [vmem:[%s1 + $0x38] sm:$0xff]
    %v61 = vld [vmem:[%s1 + $0x40] sm:$0xff]
    %v62 = vld [vmem:[%s1 + $0x48] sm:$0xff]
    %v63 = vld [vmem:[%s1 + $0x50] sm:$0xff]
    %v64 = vld [vmem:[%s1 + $0x58] sm:$0xff]
    %v65 = vld [vmem:[%s1 + $0x60] sm:$0xff]
    %v66 = vld [vmem:[%s1 + $0x68] sm:$0xff]
    %v67 = vld [vmem:[%s1 + $0x70] sm:$0xff]
    %v68 = vld [vmem:[%s1 + $0x78] sm:$0xff]
    %69 = vmatpush.msra.mxu0 %v68
    %70 = vmatpush.msra.mxu0 %v67
    %71 = vmatpush.msra.mxu0 %v66
    %72 = vmatpush.msra.mxu0 %v65
    %73 = vmatpush.msra.mxu0 %v64
    %74 = vmatpush.msra.mxu0 %v63
    %75 = vmatpush.msra.mxu0 %v62
    %76 = vmatpush.msra.mxu0 %v61
    %77 = vmatpush.msra.mxu0 %v60
    %78 = vmatpush.msra.mxu0 %v59
    %79 = vmatpush.msra.mxu0 %v58
    %80 = vmatpush.msra.mxu0 %v57
    %81 = vmatpush.msra.mxu0 %v56
    %82 = vmatpush.msra.mxu0 %v55
    %83 = vmatpush.msra.mxu0 %v54
    %84 = vmatpush.msra.mxu0 %v53
    %85 = vmatmul.f32.gmra.mxu0 %v49
    %v86 = vpop.f32.mrf.mxu0
    %v87 = vadd.f32 0.0, %v86
    %88 = vmatmul.f32.gmra.mxu0 %v50
    %v89 = vpop.f32.mrf.mxu0
    %v90 = vadd.f32 0.0, %v89
    %91 = vmatmul.f32.gmra.mxu0 %v51
    %v92 = vpop.f32.mrf.mxu0
    %v93 = vadd.f32 0.0, %v92
    %94 = vmatmul.f32.gmra.mxu0 %v52
    %v95 = vpop.f32.mrf.mxu0
    %v96 = vadd.f32 0.0, %v95
    %97 = vdwg.mxu0
    %v98 = vld [vmem:[%s2] sm:$0xff]
    %v99 = vld [vmem:[%s2 + $0x8] sm:$0xff]
    %v100 = vld [vmem:[%s2 + $0x10] sm:$0xff]
    %v101 = vld [vmem:[%s2 + $0x18] sm:$0xff]
    %v102 = vld [vmem:[%s2 + $0x20] sm:$0xff]
    %v103 = vld [vmem:[%s2 + $0x28] sm:$0xff]
    %v104 = vld [vmem:[%s2 + $0x30] sm:$0xff]
    %v105 = vld [vmem:[%s2 + $0x38] sm:$0xff]
    %v106 = vld [vmem:[%s2 + $0x40] sm:$0xff]
    %v107 = vld [vmem:[%s2 + $0x48] sm:$0xff]
    %v108 = vld [vmem:[%s2 + $0x50] sm:$0xff]
    %v109 = vld [vmem:[%s2 + $0x58] sm:$0xff]
    %v110 = vld [vmem:[%s2 + $0x60] sm:$0xff]
    %v111 = vld [vmem:[%s2 + $0x68] sm:$0xff]
    %v112 = vld [vmem:[%s2 + $0x70] sm:$0xff]
    %v113 = vld [vmem:[%s2 + $0x78] sm:$0xff]
    %v114 = vld [vmem:[%s2 + $0x80] sm:$0xff]
    %v115 = vld [vmem:[%s2 + $0x88] sm:$0xff]
    %v116 = vld [vmem:[%s2 + $0x90] sm:$0xff]
    %v117 = vld [vmem:[%s2 + $0x98] sm:$0xff]
    %vm118 = vcmask 261120
    %v120 = vsel %vm118, %v98, 0
    %v123 = vsel %vm118, %v99, 0
    %v126 = vsel %vm118, %v100, 0
    %v129 = vsel %vm118, %v101, 0
    %v132 = vsel %vm118, %v102, 0
    %v135 = vsel %vm118, %v103, 0
    %v138 = vsel %vm118, %v104, 0
    %v141 = vsel %vm118, %v105, 0
    %v144 = vsel %vm118, %v106, 0
    %v147 = vsel %vm118, %v107, 0
    %v150 = vsel %vm118, %v108, 0
    %v153 = vsel %vm118, %v109, 0
    %v156 = vsel %vm118, %v110, 0
    %v159 = vsel %vm118, %v111, 0
    %v162 = vsel %vm118, %v112, 0
    %v165 = vsel %vm118, %v113, 0
    %v168 = vsel %vm118, %v114, 0
    %v171 = vsel %vm118, %v115, 0
    %v174 = vsel %vm118, %v116, 0
    %v177 = vsel %vm118, %v117, 0
    %179 = vmatpush.msra.mxu0 0.0
    %180 = vmatpush.msra.mxu0 0.0
    %181 = vmatpush.msra.mxu0 0.0
    %182 = vmatpush.msra.mxu0 0.0
    %183 = vmatpush.msra.mxu0 0.0
    %184 = vmatpush.msra.mxu0 0.0
    %185 = vmatpush.msra.mxu0 0.0
    %186 = vmatpush.msra.mxu0 0.0
    %187 = vmatpush.msra.mxu0 0.0
    %188 = vmatpush.msra.mxu0 0.0
    %189 = vmatpush.msra.mxu0 0.0
    %190 = vmatpush.msra.mxu0 0.0
    %191 = vmatpush.msra.mxu0 %v96
    %192 = vmatpush.msra.mxu0 %v93
    %193 = vmatpush.msra.mxu0 %v90
    %194 = vmatpush.msra.mxu0 %v87
    %195 = vmatmul.f32.gmra.mxu0 %v120
    %v196 = vpop.f32.mrf.mxu0
    %v197 = vadd.f32 0.0, %v196
    %198 = vmatmul.f32.gmra.mxu0 %v123
    %v199 = vpop.f32.mrf.mxu0
    %v200 = vadd.f32 0.0, %v199
    %201 = vmatmul.f32.gmra.mxu0 %v126
    %v202 = vpop.f32.mrf.mxu0
    %v203 = vadd.f32 0.0, %v202
    %204 = vmatmul.f32.gmra.mxu0 %v129
    %v205 = vpop.f32.mrf.mxu0
    %v206 = vadd.f32 0.0, %v205
    %207 = vmatmul.f32.gmra.mxu0 %v132
    %v208 = vpop.f32.mrf.mxu0
    %v209 = vadd.f32 0.0, %v208
    %210 = vmatmul.f32.gmra.mxu0 %v135
    %v211 = vpop.f32.mrf.mxu0
    %v212 = vadd.f32 0.0, %v211
    %213 = vmatmul.f32.gmra.mxu0 %v138
    %v214 = vpop.f32.mrf.mxu0
    %v215 = vadd.f32 0.0, %v214
    %216 = vmatmul.f32.gmra.mxu0 %v141
    %v217 = vpop.f32.mrf.mxu0
    %v218 = vadd.f32 0.0, %v217
    %219 = vmatmul.f32.gmra.mxu0 %v144
    %v220 = vpop.f32.mrf.mxu0
    %v221 = vadd.f32 0.0, %v220
    %222 = vmatmul.f32.gmra.mxu0 %v147
    %v223 = vpop.f32.mrf.mxu0
    %v224 = vadd.f32 0.0, %v223
    %225 = vmatmul.f32.gmra.mxu0 %v150
    %v226 = vpop.f32.mrf.mxu0
    %v227 = vadd.f32 0.0, %v226
    %228 = vmatmul.f32.gmra.mxu0 %v153
    %v229 = vpop.f32.mrf.mxu0
    %v230 = vadd.f32 0.0, %v229
    %231 = vmatmul.f32.gmra.mxu0 %v156
    %v232 = vpop.f32.mrf.mxu0
    %v233 = vadd.f32 0.0, %v232
    %234 = vmatmul.f32.gmra.mxu0 %v159
    %v235 = vpop.f32.mrf.mxu0
    %v236 = vadd.f32 0.0, %v235
    %237 = vmatmul.f32.gmra.mxu0 %v162
    %v238 = vpop.f32.mrf.mxu0
    %v239 = vadd.f32 0.0, %v238
    %240 = vmatmul.f32.gmra.mxu0 %v165
    %v241 = vpop.f32.mrf.mxu0
    %v242 = vadd.f32 0.0, %v241
    %243 = vmatmul.f32.gmra.mxu0 %v168
    %v244 = vpop.f32.mrf.mxu0
    %v245 = vadd.f32 0.0, %v244
    %246 = vmatmul.f32.gmra.mxu0 %v171
    %v247 = vpop.f32.mrf.mxu0
    %v248 = vadd.f32 0.0, %v247
    %249 = vmatmul.f32.gmra.mxu0 %v174
    %v250 = vpop.f32.mrf.mxu0
    %v251 = vadd.f32 0.0, %v250
    %252 = vmatmul.f32.gmra.mxu0 %v177
    %v253 = vpop.f32.mrf.mxu0
    %v254 = vadd.f32 0.0, %v253
    %255 = vdwg.mxu0
    %v256 = vld [vmem:[%s4] sm:$0xff]
    %v257 = vld [vmem:[%s4 + $0x8] sm:$0xff]
    %v258 = vld [vmem:[%s4 + $0x10] sm:$0xff]
    %v259 = vld [vmem:[%s4 + $0x18] sm:$0xff]
    %v260 = vld [vmem:[%s3] sm:$0xff]
    %v261 = vld [vmem:[%s3 + $0x8] sm:$0xff]
    %v262 = vld [vmem:[%s3 + $0x10] sm:$0xff]
    %v263 = vld [vmem:[%s3 + $0x18] sm:$0xff]
    %v265 = vsel %vm118, %v197, 0
    %v268 = vsel %vm118, %v200, 0
    %v271 = vsel %vm118, %v203, 0
    %v274 = vsel %vm118, %v206, 0
    %276 = vmatpush.msra.mxu0 0.0
    %277 = vmatpush.msra.mxu0 0.0
    %278 = vmatpush.msra.mxu0 0.0
    %279 = vmatpush.msra.mxu0 0.0
    %280 = vmatpush.msra.mxu0 0.0
    %281 = vmatpush.msra.mxu0 0.0
    %282 = vmatpush.msra.mxu0 0.0
    %283 = vmatpush.msra.mxu0 0.0
    %284 = vmatpush.msra.mxu0 0.0
    %285 = vmatpush.msra.mxu0 0.0
    %286 = vmatpush.msra.mxu0 0.0
    %287 = vmatpush.msra.mxu0 0.0
    %288 = vmatpush.msra.mxu0 %v263
    %289 = vmatpush.msra.mxu0 %v262
    %290 = vmatpush.msra.mxu0 %v261
    %291 = vmatpush.msra.mxu0 %v260
    %292 = vmatmul.f32.gmra.mxu0 %v265
    %v293 = vpop.f32.mrf.mxu0
    %v294 = vadd.f32 0.0, %v293
    %295 = vmatmul.f32.gmra.mxu0 %v268
    %v296 = vpop.f32.mrf.mxu0
    %v297 = vadd.f32 0.0, %v296
    %298 = vmatmul.f32.gmra.mxu0 %v271
    %v299 = vpop.f32.mrf.mxu0
    %v300 = vadd.f32 0.0, %v299
    %301 = vmatmul.f32.gmra.mxu0 %v274
    %v302 = vpop.f32.mrf.mxu0
    %v303 = vadd.f32 0.0, %v302
    %304 = vdwg.mxu0
    %v305 = vadd.f32 %v256, %v294
    %v306 = vadd.f32 %v257, %v297
    %v307 = vadd.f32 %v258, %v300
    %v308 = vadd.f32 %v259, %v303
    %v309 = vld [vmem:[%s3 + $0x20] sm:$0xff]
    %v310 = vld [vmem:[%s3 + $0x28] sm:$0xff]
    %v311 = vld [vmem:[%s3 + $0x30] sm:$0xff]
    %v312 = vld [vmem:[%s3 + $0x38] sm:$0xff]
    %v314 = vsel %vm118, %v209, 0
    %v317 = vsel %vm118, %v212, 0
    %v320 = vsel %vm118, %v215, 0
    %v323 = vsel %vm118, %v218, 0
    %325 = vmatpush.msra.mxu0 0.0
    %326 = vmatpush.msra.mxu0 0.0
    %327 = vmatpush.msra.mxu0 0.0
    %328 = vmatpush.msra.mxu0 0.0
    %329 = vmatpush.msra.mxu0 0.0
    %330 = vmatpush.msra.mxu0 0.0
    %331 = vmatpush.msra.mxu0 0.0
    %332 = vmatpush.msra.mxu0 0.0
    %333 = vmatpush.msra.mxu0 0.0
    %334 = vmatpush.msra.mxu0 0.0
    %335 = vmatpush.msra.mxu0 0.0
    %336 = vmatpush.msra.mxu0 0.0
    %337 = vmatpush.msra.mxu0 %v312
    %338 = vmatpush.msra.mxu0 %v311
    %339 = vmatpush.msra.mxu0 %v310
    %340 = vmatpush.msra.mxu0 %v309
    %341 = vmatmul.f32.gmra.mxu0 %v314
    %v342 = vpop.f32.mrf.mxu0
    %v343 = vadd.f32 0.0, %v342
    %344 = vmatmul.f32.gmra.mxu0 %v317
    %v345 = vpop.f32.mrf.mxu0
    %v346 = vadd.f32 0.0, %v345
    %347 = vmatmul.f32.gmra.mxu0 %v320
    %v348 = vpop.f32.mrf.mxu0
    %v349 = vadd.f32 0.0, %v348
    %350 = vmatmul.f32.gmra.mxu0 %v323
    %v351 = vpop.f32.mrf.mxu0
    %v352 = vadd.f32 0.0, %v351
    %353 = vdwg.mxu0
    %v354 = vadd.f32 %v305, %v343
    %v355 = vadd.f32 %v306, %v346
    %v356 = vadd.f32 %v307, %v349
    %v357 = vadd.f32 %v308, %v352
    %v358 = vld [vmem:[%s3 + $0x40] sm:$0xff]
    %v359 = vld [vmem:[%s3 + $0x48] sm:$0xff]
    %v360 = vld [vmem:[%s3 + $0x50] sm:$0xff]
    %v361 = vld [vmem:[%s3 + $0x58] sm:$0xff]
    %v363 = vsel %vm118, %v221, 0
    %v366 = vsel %vm118, %v224, 0
    %v369 = vsel %vm118, %v227, 0
    %v372 = vsel %vm118, %v230, 0
    %374 = vmatpush.msra.mxu0 0.0
    %375 = vmatpush.msra.mxu0 0.0
    %376 = vmatpush.msra.mxu0 0.0
    %377 = vmatpush.msra.mxu0 0.0
    %378 = vmatpush.msra.mxu0 0.0
    %379 = vmatpush.msra.mxu0 0.0
    %380 = vmatpush.msra.mxu0 0.0
    %381 = vmatpush.msra.mxu0 0.0
    %382 = vmatpush.msra.mxu0 0.0
    %383 = vmatpush.msra.mxu0 0.0
    %384 = vmatpush.msra.mxu0 0.0
    %385 = vmatpush.msra.mxu0 0.0
    %386 = vmatpush.msra.mxu0 %v361
    %387 = vmatpush.msra.mxu0 %v360
    %388 = vmatpush.msra.mxu0 %v359
    %389 = vmatpush.msra.mxu0 %v358
    %390 = vmatmul.f32.gmra.mxu0 %v363
    %v391 = vpop.f32.mrf.mxu0
    %v392 = vadd.f32 0.0, %v391
    %393 = vmatmul.f32.gmra.mxu0 %v366
    %v394 = vpop.f32.mrf.mxu0
    %v395 = vadd.f32 0.0, %v394
    %396 = vmatmul.f32.gmra.mxu0 %v369
    %v397 = vpop.f32.mrf.mxu0
    %v398 = vadd.f32 0.0, %v397
    %399 = vmatmul.f32.gmra.mxu0 %v372
    %v400 = vpop.f32.mrf.mxu0
    %v401 = vadd.f32 0.0, %v400
    %402 = vdwg.mxu0
    %v403 = vadd.f32 %v354, %v392
    %v404 = vadd.f32 %v355, %v395
    %v405 = vadd.f32 %v356, %v398
    %v406 = vadd.f32 %v357, %v401
    %v407 = vld [vmem:[%s3 + $0x60] sm:$0xff]
    %v408 = vld [vmem:[%s3 + $0x68] sm:$0xff]
    %v409 = vld [vmem:[%s3 + $0x70] sm:$0xff]
    %v410 = vld [vmem:[%s3 + $0x78] sm:$0xff]
    %v412 = vsel %vm118, %v233, 0
    %v415 = vsel %vm118, %v236, 0
    %v418 = vsel %vm118, %v239, 0
    %v421 = vsel %vm118, %v242, 0
    %423 = vmatpush.msra.mxu0 0.0
    %424 = vmatpush.msra.mxu0 0.0
    %425 = vmatpush.msra.mxu0 0.0
    %426 = vmatpush.msra.mxu0 0.0
    %427 = vmatpush.msra.mxu0 0.0
    %428 = vmatpush.msra.mxu0 0.0
    %429 = vmatpush.msra.mxu0 0.0
    %430 = vmatpush.msra.mxu0 0.0
    %431 = vmatpush.msra.mxu0 0.0
    %432 = vmatpush.msra.mxu0 0.0
    %433 = vmatpush.msra.mxu0 0.0
    %434 = vmatpush.msra.mxu0 0.0
    %435 = vmatpush.msra.mxu0 %v410
    %436 = vmatpush.msra.mxu0 %v409
    %437 = vmatpush.msra.mxu0 %v408
    %438 = vmatpush.msra.mxu0 %v407
    %439 = vmatmul.f32.gmra.mxu0 %v412
    %v440 = vpop.f32.mrf.mxu0
    %v441 = vadd.f32 0.0, %v440
    %442 = vmatmul.f32.gmra.mxu0 %v415
    %v443 = vpop.f32.mrf.mxu0
    %v444 = vadd.f32 0.0, %v443
    %445 = vmatmul.f32.gmra.mxu0 %v418
    %v446 = vpop.f32.mrf.mxu0
    %v447 = vadd.f32 0.0, %v446
    %448 = vmatmul.f32.gmra.mxu0 %v421
    %v449 = vpop.f32.mrf.mxu0
    %v450 = vadd.f32 0.0, %v449
    %451 = vdwg.mxu0
    %v452 = vadd.f32 %v403, %v441
    %v453 = vadd.f32 %v404, %v444
    %v454 = vadd.f32 %v405, %v447
    %v455 = vadd.f32 %v406, %v450
    %v456 = vld [vmem:[%s3 + $0x80] sm:$0xff]
    %v457 = vld [vmem:[%s3 + $0x88] sm:$0xff]
    %v458 = vld [vmem:[%s3 + $0x90] sm:$0xff]
    %v459 = vld [vmem:[%s3 + $0x98] sm:$0xff]
    %v461 = vsel %vm118, %v245, 0
    %v464 = vsel %vm118, %v248, 0
    %v467 = vsel %vm118, %v251, 0
    %v470 = vsel %vm118, %v254, 0
    %472 = vmatpush.msra.mxu0 0.0
    %473 = vmatpush.msra.mxu0 0.0
    %474 = vmatpush.msra.mxu0 0.0
    %475 = vmatpush.msra.mxu0 0.0
    %476 = vmatpush.msra.mxu0 0.0
    %477 = vmatpush.msra.mxu0 0.0
    %478 = vmatpush.msra.mxu0 0.0
    %479 = vmatpush.msra.mxu0 0.0
    %480 = vmatpush.msra.mxu0 0.0
    %481 = vmatpush.msra.mxu0 0.0
    %482 = vmatpush.msra.mxu0 0.0
    %483 = vmatpush.msra.mxu0 0.0
    %484 = vmatpush.msra.mxu0 %v459
    %485 = vmatpush.msra.mxu0 %v458
    %486 = vmatpush.msra.mxu0 %v457
    %487 = vmatpush.msra.mxu0 %v456
    %488 = vmatmul.f32.gmra.mxu0 %v461
    %v489 = vpop.f32.mrf.mxu0
    %v490 = vadd.f32 0.0, %v489
    %491 = vmatmul.f32.gmra.mxu0 %v464
    %v492 = vpop.f32.mrf.mxu0
    %v493 = vadd.f32 0.0, %v492
    %494 = vmatmul.f32.gmra.mxu0 %v467
    %v495 = vpop.f32.mrf.mxu0
    %v496 = vadd.f32 0.0, %v495
    %497 = vmatmul.f32.gmra.mxu0 %v470
    %v498 = vpop.f32.mrf.mxu0
    %v499 = vadd.f32 0.0, %v498
    %500 = vdwg.mxu0
    %v501 = vadd.f32 %v452, %v490
    %v502 = vadd.f32 %v453, %v493
    %v503 = vadd.f32 %v454, %v496
    %v504 = vadd.f32 %v455, %v499
    %v505 = vmax.f32 %v501, %v502
    %v506 = vrot.slane %v505, 4
    %v507 = vmax.f32 %v505, %v506
    %v508 = vrot.slane %v507, 2
    %v509 = vmax.f32 %v507, %v508
    %v510 = vrot.slane %v509, 1
    %v511 = vmax.f32 %v509, %v510
    %v512 = vmax.f32 %v503, %v504
    %v513 = vrot.slane %v512, 4
    %v514 = vmax.f32 %v512, %v513
    %v515 = vrot.slane %v514, 2
    %v516 = vmax.f32 %v514, %v515
    %v517 = vrot.slane %v516, 1
    %v518 = vmax.f32 %v516, %v517
    %v519 = vld [vmem:[%s5] sm:$0xff]
    %v520 = vld [vmem:[%s5 + $0x8] sm:$0xff]
    %v521 = vld [vmem:[%s5 + $0x10] sm:$0xff]
    %v522 = vld [vmem:[%s5 + $0x18] sm:$0xff]
    %v523 = vld [vmem:[%s5 + $0x20] sm:$0xff]
    %v524 = vld [vmem:[%s5 + $0x28] sm:$0xff]
    %v525 = vld [vmem:[%s5 + $0x30] sm:$0xff]
    %v526 = vld [vmem:[%s5 + $0x38] sm:$0xff]
    %v527 = vld [vmem:[%s5 + $0x40] sm:$0xff]
    %v528 = vld [vmem:[%s5 + $0x48] sm:$0xff]
    %v529 = vld [vmem:[%s5 + $0x50] sm:$0xff]
    %v530 = vld [vmem:[%s5 + $0x58] sm:$0xff]
    %v531 = vld [vmem:[%s5 + $0x60] sm:$0xff]
    %v532 = vld [vmem:[%s5 + $0x68] sm:$0xff]
    %v533 = vld [vmem:[%s5 + $0x70] sm:$0xff]
    %v534 = vld [vmem:[%s5 + $0x78] sm:$0xff]
    %v535 = vld [vmem:[%s6] sm:$0x1]
    %v537 = vperm.slane %v535, 0
    %vm541 = vcmask 1041409
    %v542 = vsel %vm541, %v518, %v511
    %544 = vmatpush.msra.mxu0 %v534
    %545 = vmatpush.msra.mxu0 %v533
    %546 = vmatpush.msra.mxu0 %v532
    %547 = vmatpush.msra.mxu0 %v531
    %548 = vmatpush.msra.mxu0 %v530
    %549 = vmatpush.msra.mxu0 %v529
    %550 = vmatpush.msra.mxu0 %v528
    %551 = vmatpush.msra.mxu0 %v527
    %552 = vmatpush.msra.mxu0 %v526
    %553 = vmatpush.msra.mxu0 %v525
    %554 = vmatpush.msra.mxu0 %v524
    %555 = vmatpush.msra.mxu0 %v523
    %556 = vmatpush.msra.mxu0 %v522
    %557 = vmatpush.msra.mxu0 %v521
    %558 = vmatpush.msra.mxu0 %v520
    %559 = vmatpush.msra.mxu0 %v519
    %560 = vmatmul.f32.gmra.mxu0 %v542
    %v561 = vpop.f32.mrf.mxu0
    %v562 = vadd.f32 %v537, %v561
    %563 = vdwg.mxu0
    %vm564 = vcmask 1041408
    %v565 = vsel %vm564, %v562, -inf
    %566 = vmax.xlane.f32.xlu0 %v565
    %v567 = vpop.xlane.xlu0 %566
    %v568 = vsub.f32 %v562, %v567
    %v569 = vmul.f32 %v568, 1.442695
    %v570 = vpow.pop %v569
    %v571 = vsel %vm564, %v570, 0.0
    %572 = vadd.xlane.f32.xlu0 %v571
    %v573 = vpop.xlane.xlu0 %572
    %v574 = vrcp.pop %v573
    %v575 = vmul.f32 %v573, %v574
    %v576 = vsub.f32 1.0, %v575
    %v577 = vmul.f32 %v574, %v576
    %v578 = vadd.f32 %v574, %v577
    %vm579 = vweird.f32 %v573
    %vm580 = vweird.f32 %v574
    %vm581 = vmor %vm579, %vm580
    %v582 = vsel %vm581, %v574, %v578
    %v583 = vand.u32 2147483647, %v573
    %vm584 = vcmp.eq.f32.partialorder %v583, 8.507059e+37
    %v585 = vand.u32 %v573, 2147483648
    %v586 = vor.u32 1.1754944e-38, %v585
    %v587 = vsel %vm584, %v586, %v582
    %v588 = vmul.f32 %v570, %v587
    %589 = vst [vmem:[#allocation2] sm:$0x3] %v588
    // Predicated region
    $region30: #{textcnn_forward.1} parent=1 // pred_check
      _
    $region31: #{textcnn_forward.1} parent=1 // pred_check_branch
      %591 = sbr.rel (0) target = $region33
    $region32: #{textcnn_forward.1} parent=1 // pred_region
      %593 = vsyncadd [#allocation3], 0
      %s595 = sshll.u32 [#allocation2], 4
      %s596 = int_to_ptr.vmem [resolvable:$true] %s595
      %s597 = sshll.u32 %s7, 4
      %s598 = int_to_ptr.hbm [resolvable:$true] %s597
      %600 = dma.vmem_to_hbm [thread:$0]  %s596, 32, %s598, [#allocation3]
    $region33: #{textcnn_forward.1} parent=1 // pred_fallthru
      _
    // Predicated region
    $region34: #{textcnn_forward.1} parent=1 // pred_check
      _
    $region35: #{textcnn_forward.1} parent=1 // pred_check_branch
      %602 = sbr.rel (0) target = $region37
    $region36: #{textcnn_forward.1} parent=1 // pred_region
      %604 = dma.done [#allocation3], 32
    $region37: #{textcnn_forward.1} parent=1 // pred_fallthru
      _
    %605 = vsyncpa [#allocation3], 1

</llo_original>
